<compile_context>
chip_gen: v5e
topology: v5e:2x2
jax: 0.10.0
libtpu: 0.0.40
codegen_flags: <defaults>
</compile_context>

<pallas_src>
import functools

import jax
import jax.numpy as jnp
from jax.experimental import pallas as pl
from jax.experimental.pallas import tpu as pltpu


# 3x3 stencil tap order: t = (dy+1)*3 + (dx+1), matching a row-major (ky, kx) kernel.
_OFFS = tuple((dy, dx) for dy in (-1, 0, 1) for dx in (-1, 0, 1))

# pltpu.roll is expected to follow jnp.roll semantics (out[i] = x[i - shift]);
# _probe_roll_sign() verifies the direction on hardware once, before tracing the kernel.
_ROLL_SIGN = -1


def _probe_roll_sign():
    """Set sign s such that pltpu.roll(x, (s*k) % n, axis=1)[:, i] == x[:, i + k]."""
    global _ROLL_SIGN

    def kern(x_ref, o_ref):
        o_ref[...] = pltpu.roll(x_ref[...], 1, axis=1)

    x = jnp.tile(jnp.arange(128, dtype=jnp.float32)[None, :], (8, 1))
    y = pl.pallas_call(kern, out_shape=jax.ShapeDtypeStruct((8, 128), jnp.float32))(x)
    _ROLL_SIGN = -1 if float(y[0, 1]) == 0.0 else 1
    return _ROLL_SIGN


# ----------------------------------------------------------------------------
# Fused Pallas kernel (B images per grid step, activations lane-dense (B*C, H*W))
# ----------------------------------------------------------------------------
def _residual_block_kernel(x_ref, w1_ref, bn1s_ref, bn1b_ref, w2_ref,
                           bw_ref, bb_ref, ww_ref, bn2s_ref, bn2b_ref,
                           o_ref, *, H, W, roll_sign, e_lambda):
    HW = H * W
    x = x_ref[0].astype(jnp.float32)               # (BC, HW): B images x C channels
    BC = x.shape[0]

    # ---- lane-index masks & sign fields: built ONCE per step, shared by every conv ----
    lane = jax.lax.broadcasted_iota(jnp.int32, (1, HW), 1)
    col = lane % W
    row = lane // W

    def stencil_masks(step):
        cl, cr = col >= step, col <= (W - 1 - step)
        rt, rb = row >= step, row <= (H - 1 - step)
        masks = []
        for dy, dx in _OFFS:
            m = None
            if dx < 0:
                m = cl
            elif dx > 0:
                m = cr
            if dy < 0:
                m = rt if m is None else m & rt
            elif dy > 0:
                m = rb if m is None else m & rb
            masks.append(m)
        return masks

    masks1 = stencil_masks(1)      # full-res 3x3 stencil (dense convs, base dw conv)
    masks2 = stencil_masks(2)      # half-res 3x3 stencil (wavelet subband dw conv)
    ce = (col % 2) == 0
    re = (row % 2) == 0
    sh = jnp.where(ce, 1.0, -1.0).astype(jnp.float32)   # +1 even col / -1 odd col
    sv = jnp.where(re, 1.0, -1.0).astype(jnp.float32)   # +1 even row / -1 odd row
    svh = sh * sv

    def shifted(img, dy, dx, step, mask):
        """img value at (row + dy*step, col + dx*step); zero outside the image."""
        off = (dy * W + dx) * step
        s = img if off == 0 else pltpu.roll(img, (roll_sign * off) % HW, axis=1)
        return s if mask is None else jnp.where(mask, s, 0.0)

    def conv3x3(img, w_bd):
        """Dense 3x3 conv (pad 1), all B images at once: one MXU matmul of the
        block-diagonal im2col weight against the sublane-stacked taps."""
        patch = jnp.concatenate(
            [shifted(img, dy, dx, 1, masks1[t]) for t, (dy, dx) in enumerate(_OFFS)],
            axis=0)                                     # (9*BC, HW)
        return jnp.dot(w_bd, patch, preferred_element_type=jnp.float32)

    def dwconv3x3(img, w9, step, masks):
        """Depthwise 3x3 conv on the VPU (step=2 == conv in Haar subband space)."""
        acc = None
        for t, (dy, dx) in enumerate(_OFFS):
            term = shifted(img, dy, dx, step, masks[t]) * w9[:, t:t + 1]
            acc = term if acc is None else acc + term
        return acc

    # conv1 -> BN1 (folded affine) -> ReLU
    h = conv3x3(x, w1_ref[...])
    h = jnp.maximum(h * bn1s_ref[...] + bn1b_ref[...], 0.0)
    # conv2 (no bias / no affine)
    h = conv3x3(h, w2_ref[...])

    # ---- WTConv2d, base branch: depthwise 3x3 + bias (_ScaleModule folded host-side) ----
    base = dwconv3x3(h, bw_ref[...], 1, masks1) + bb_ref[...]

    # ---- WTConv2d, wavelet branch: matrix-free Haar (wt_levels=1, 'db1') ----
    # 2x2-block partner values (horizontal / vertical / diagonal neighbours).
    ph = jnp.where(ce, shifted(h, 0, 1, 1, None), shifted(h, 0, -1, 1, None))
    pv = jnp.where(re, shifted(h, 1, 0, 1, None), shifted(h, -1, 0, 1, None))
    pd = jnp.where(re, shifted(ph, 1, 0, 1, None), shifted(ph, -1, 0, 1, None))
    # DWT: block-constant subband fields (each value replicated over its 2x2 block).
    ll = 0.5 * (h + ph + pv + pd)
    lh = (0.5 * sv) * (h + ph - pv - pd)
    hl = (0.5 * sh) * (h - ph + pv - pd)
    hh = (0.5 * svh) * (h - ph - pv + pd)
    # Per-subband depthwise 3x3 conv in subband space == stride-2 taps on the
    # interleaved fields; all 4 subbands stacked along sublanes (8 rolls total).
    sub = jnp.concatenate([ll, lh, hl, hh], axis=0)     # (4*BC, HW)
    csub = dwconv3x3(sub, ww_ref[...], 2, masks2)       # (4*BC, HW), scale folded into w
    cll = csub[0 * BC:1 * BC]
    clh = csub[1 * BC:2 * BC]
    chl = csub[2 * BC:3 * BC]
    chh = csub[3 * BC:4 * BC]
    # IDWT at every pixel via per-position subband signs.
    x_tag = 0.5 * (cll + sv * clh + sh * chl + svh * chh)

    out = base + x_tag
    # BN2 (folded affine) + identity shortcut
    out = out * bn2s_ref[...] + bn2b_ref[...] + x
    # SimAM (per image-channel row); divide moved to the EUP approx reciprocal.
    mu = jnp.mean(out, axis=1, keepdims=True)
    dsq = (out - mu) ** 2
    var = jnp.sum(dsq, axis=1, keepdims=True) * (1.0 / float(HW - 1))
    inv = pl.reciprocal(4.0 * (var + e_lambda), approx=True)
    out = out * jax.nn.sigmoid(dsq * inv + 0.5)
    # final ReLU
    o_ref[0] = jnp.maximum(out, 0.0).astype(o_ref.dtype)


# ----------------------------------------------------------------------------
# pallas_call wrapper
# ----------------------------------------------------------------------------
def residual_block_pallas(x_nchw, kp):
    N, C, H, W = x_nchw.shape
    assert H % 2 == 0 and W % 2 == 0, "Haar DWT needs even spatial dims"
    HW = H * W
    BC = kp['bn1_scale'].shape[0]                  # = images_per_step * C (baked into params)
    B = BC // C
    assert BC == B * C and N % B == 0
    G = N // B
    x2 = x_nchw.reshape(G, BC, HW)                 # free reshape, no transpose

    kernel = functools.partial(_residual_block_kernel, H=H, W=W,
                               roll_sign=_ROLL_SIGN, e_lambda=1e-4)

    def cspec(*shape):                             # whole-array, grid-constant block
        nd = len(shape)
        return pl.BlockSpec(shape, lambda n: (0,) * nd)

    out = pl.pallas_call(
        kernel,
        out_shape=jax.ShapeDtypeStruct((G, BC, HW), x_nchw.dtype),
        grid=(G,),
        in_specs=[
            pl.BlockSpec((1, BC, HW), lambda n: (n, 0, 0)),   # x (B images / program)
            cspec(BC, 9 * BC),                                # conv1 block-diag im2col w
            cspec(BC, 1), cspec(BC, 1),                       # BN1 scale / shift
            cspec(BC, 9 * BC),                                # conv2 block-diag im2col w
            cspec(BC, 9), cspec(BC, 1),                       # WT base dw w / bias (scaled)
            cspec(4 * BC, 9),                                 # WT wavelet dw w (scaled)
            cspec(BC, 1), cspec(BC, 1),                       # BN2 scale / shift
        ],
        out_specs=pl.BlockSpec((1, BC, HW), lambda n: (n, 0, 0)),
        compiler_params=pltpu.CompilerParams(
            dimension_semantics=("parallel",)),
    )(x2, kp['w1'], kp['bn1_scale'], kp['bn1_shift'], kp['w2'],
      kp['base_w'], kp['base_b'], kp['wav_w'],
      kp['bn2_scale'], kp['bn2_shift'])
    return out.reshape(N, C, H, W)


# ----------------------------------------------------------------------------
# Host-side parameter preparation (PyTorch layouts -> kernel-ready, scales folded)
# ----------------------------------------------------------------------------
def choose_images_per_step(N, C, max_rows=256):
    divisors = [d for d in range(1, N + 1) if N % d == 0]
    cands = [d for d in divisors if d * C <= max_rows] or [1]
    # keep the grid length >= 2 when possible so both v7x TensorCores get work
    pref = [d for d in cands if N // d >= 2] or cands
    # prefer filling full 8-row sublane tiles
    full = [d for d in pref if (d * C) % 8 == 0]
    return max(full) if full else max(pref)


def _block_diag_im2col(w_pt, B):
    """(Cout, Cin, 3, 3) -> (B*Cout, 9*B*Cin) block-diagonal im2col weight so the
    dense conv over B sublane-stacked images is a single MXU matmul."""
    co, ci = w_pt.shape[0], w_pt.shape[1]
    w9 = jnp.transpose(w_pt, (0, 2, 3, 1)).reshape(co, 9, ci)        # [cout, t, cin]
    eye = jnp.eye(B, dtype=w_pt.dtype)
    m = eye[:, None, None, :, None] * w9[None, :, :, None, :]        # (B, co, 9, B, ci)
    return m.reshape(B * co, 9 * B * ci)


def prepare_params(p, C, images_per_step):
    B = images_per_step

    def tile_rows(a):                              # (C, k) -> (B*C, k)
        return jnp.tile(a.reshape(C, -1), (B, 1))

    # WTConv base depthwise branch: fold _ScaleModule into weight and bias
    base_w = p['wt_base_w'].reshape(C, 9) * p['wt_base_scale'][:, None]
    base_b = (p['wt_base_b'] * p['wt_base_scale']).reshape(C, 1)
    # WTConv wavelet depthwise branch: PyTorch channel index is c*4 + subband
    wav = p['wt_wav_w'].reshape(C, 4, 9) * p['wt_wav_scale'].reshape(C, 4)[..., None]
    wav = jnp.transpose(wav, (1, 0, 2))            # (4, C, 9): [subband, channel, tap]
    wav = jnp.tile(wav, (1, B, 1)).reshape(4 * B * C, 9)

    return dict(
        w1=_block_diag_im2col(p['conv1_w'], B),
        bn1_scale=tile_rows(p['bn1_scale'].reshape(C, 1)),
        bn1_shift=tile_rows(p['bn1_shift'].reshape(C, 1)),
        w2=_block_diag_im2col(p['conv2_w'], B),
        base_w=tile_rows(base_w),
        base_b=tile_rows(base_b),
        wav_w=wav,
        bn2_scale=tile_rows(p['bn2_scale'].reshape(C, 1)),
        bn2_shift=tile_rows(p['bn2_shift'].reshape(C, 1)),
    )


# ----------------------------------------------------------------------------
# Deterministic synthetic parameters (PyTorch layouts, eval-mode folded BN)
# ----------------------------------------------------------------------------
def init_params(key, C, eps=1e-5):
    ks = jax.random.split(key, 8)

    def folded_bn(k, c):
        kg, kb, km, kv = jax.random.split(k, 4)
        gamma = jax.random.uniform(kg, (c,), jnp.float32, 0.5, 1.5)
        beta = 0.1 * jax.random.normal(kb, (c,), jnp.float32)
        mean = 0.1 * jax.random.normal(km, (c,), jnp.float32)
        var = jax.random.uniform(kv, (c,), jnp.float32, 0.5, 1.5)
        scale = gamma / jnp.sqrt(var + eps)
        return scale, beta - mean * scale

    p = {}
    p['conv1_w'] = 0.15 * jax.random.normal(ks[0], (C, C, 3, 3), jnp.float32)
    p['bn1_scale'], p['bn1_shift'] = folded_bn(ks[1], C)
    p['conv2_w'] = 0.15 * jax.random.normal(ks[2], (C, C, 3, 3), jnp.float32)
    # WTConv2d params (base depthwise conv has bias; wavelet depthwise has none)
    p['wt_base_w'] = 0.2 * jax.random.normal(ks[3], (C, 1, 3, 3), jnp.float32)
    p['wt_base_b'] = 0.1 * jax.random.normal(ks[4], (C,), jnp.float32)
    p['wt_base_scale'] = jnp.ones((C,), jnp.float32)            # _ScaleModule init 1.0
    p['wt_wav_w'] = 0.3 * jax.random.normal(ks[5], (4 * C, 1, 3, 3), jnp.float32)
    p['wt_wav_scale'] = jnp.full((4 * C,), 0.1, jnp.float32)    # _ScaleModule init 0.1
    p['bn2_scale'], p['bn2_shift'] = folded_bn(ks[6], C)
    return p


# ----------------------------------------------------------------------------
# Pure-JAX reference (independent check of the fused kernel's semantics)
# ----------------------------------------------------------------------------
def residual_block_reference(x, p, e_lambda=1e-4):
    N, C, H, W = x.shape
    hp = jax.lax.Precision.HIGHEST

    def conv(inp, w, groups=1):
        return jax.lax.conv_general_dilated(
            inp, w, (1, 1), ((1, 1), (1, 1)),
            dimension_numbers=('NCHW', 'OIHW', 'NCHW'),
            feature_group_count=groups, precision=hp)

    bc = lambda v: v.reshape(1, -1, 1, 1)
    out = conv(x, p['conv1_w'])
    out = jnp.maximum(out * bc(p['bn1_scale']) + bc(p['bn1_shift']), 0.0)
    out = conv(out, p['conv2_w'])
    # WTConv2d
    base = (conv(out, p['wt_base_w'], groups=C) + bc(p['wt_base_b'])) * bc(p['wt_base_scale'])
    a = out[:, :, 0::2, 0::2]; b = out[:, :, 0::2, 1::2]
    c = out[:, :, 1::2, 0::2]; d = out[:, :, 1::2, 1::2]
    ll = (a + b + c + d) * 0.5; lh = (a + b - c - d) * 0.5
    hl = (a - b + c - d) * 0.5; hh = (a - b - c + d) * 0.5
    ct = jnp.stack([ll, lh, hl, hh], axis=2).reshape(N, 4 * C, H // 2, W // 2)
    ct = conv(ct, p['wt_wav_w'], groups=4 * C) * bc(p['wt_wav_scale'])
    ct = ct.reshape(N, C, 4, H // 2, W // 2)
    ll, lh, hl, hh = ct[:, :, 0], ct[:, :, 1], ct[:, :, 2], ct[:, :, 3]
    a = (ll + lh + hl + hh) * 0.5; b = (ll + lh - hl - hh) * 0.5
    c = (ll - lh + hl - hh) * 0.5; d = (ll - lh - hl + hh) * 0.5
    top = jnp.stack([a, b], axis=-1).reshape(N, C, H // 2, W)
    bot = jnp.stack([c, d], axis=-1).reshape(N, C, H // 2, W)
    x_tag = jnp.stack([top, bot], axis=3).reshape(N, C, H, W)
    out = base + x_tag
    # BN2 + identity shortcut + SimAM + ReLU
    out = out * bc(p['bn2_scale']) + bc(p['bn2_shift']) + x
    mu = jnp.mean(out, axis=(2, 3), keepdims=True)
    dsq = (out - mu) ** 2
    v = jnp.sum(dsq, axis=(2, 3), keepdims=True) / (H * W - 1)
    out = out * jax.nn.sigmoid(dsq / (4.0 * (v + e_lambda)) + 0.5)
    return jnp.maximum(out, 0.0)


if __name__ == "__main__":
    _probe_roll_sign()                     # resolve pltpu.roll direction once, pre-trace

    key = jax.random.PRNGKey(0)
    kx, kp_key = jax.random.split(key)
    N, C, H, W = 8, 4, 16, 16              # in_channels = out_channels = 4, stride = 1
    x_nchw = jax.random.normal(kx, (N, C, H, W), jnp.float32)
    params = init_params(kp_key, C)

    B = choose_images_per_step(N, C)       # -> 4 images/step: B*C=16 rows, grid = 2
    kparams = prepare_params(params, C, B)

    run = jax.jit(residual_block_pallas)
    y = jax.block_until_ready(run(x_nchw, kparams))

    assert y.shape == (N, C, H, W)
    assert bool(jnp.all(jnp.isfinite(y)))
    assert bool(jnp.all(y >= 0.0))         # final ReLU

    y_ref = jax.block_until_ready(jax.jit(residual_block_reference)(x_nchw, params))
    err = float(jnp.max(jnp.abs(y - y_ref)))
    assert err < 2e-2, f"mismatch vs reference: max abs err {err}"

    print("KERNEL_OK")
</pallas_src>

<mosaic_0001>
module attributes {stable_mosaic.version = 11 : i64} {
  func.func @kern(%arg0: memref<8x128xf32, #tpu.memory_space<vmem>>, %arg1: memref<8x128xf32, #tpu.memory_space<vmem>>) attributes {dimension_semantics = [], scalar_prefetch = 0 : i64, scratch_operands = 0 : i64, tpu.core_type = #tpu.core_type<tc>} {
    %c0 = arith.constant 0 : index
    %c0_0 = arith.constant 0 : index
    %0 = vector.load %arg0[%c0, %c0_0] : memref<8x128xf32, #tpu.memory_space<vmem>>, vector<8x128xf32>
    %c1_i32 = arith.constant 1 : i32
    %1 = tpu.dynamic_rotate %0 by %c1_i32 dim 1 : vector<8x128xf32>, i32 -> vector<8x128xf32>
    %c0_1 = arith.constant 0 : index
    %c0_2 = arith.constant 0 : index
    %2 = vector.load %arg1[%c0_1, %c0_2] : memref<8x128xf32, #tpu.memory_space<vmem>>, vector<8x128xf32>
    tpu.vector_store %arg1[%c0_1, %c0_2], %1 {strides = array<i32>} : memref<8x128xf32, #tpu.memory_space<vmem>>, vector<8x128xf32>,
    return
  }
}

</mosaic_0001>

<llo_original>
// kernel: tpu_custom_call.1
$region0: #{tpu_custom_call.1}
  #allocation0 [shape = 'u32[]', space=smem, size = 0x4, offset = 0x4, fixed_abs, tag = 'smem constant byte address 0x4 - core index']
  #allocation1 [shape = 'u32[72,128]{1,0:T(1,128)}', space=vmem, size = 0x9000, scoped, tag = 'internal scratch']
  %s0 = inlined_call_operand.hbm [shape: f32[8,128], index: 0, kind: input, shape index: {}]
  %s1 = inlined_call_operand.hbm [shape: f32[8,128], index: 1, kind: output, shape index: {}]
  %s2 = sld [smem:[#allocation0]]
  $region18: #{tpu_custom_call.1} parent=0
    _
  %s4 = ssub.s32 1, %s2
  %s5 = scalar_select 0, %s4, %s2
  $region1: #{tpu_custom_call.1} parent=0
    #allocation2 [shape = 'u8[4096]{0}', space=vmem, size = 0x1000, scoped, tag = 'input window, operand 0, single buffered']
    #allocation3 [shape = 's32[1]{0}', space=sflag, size = 0x4, scoped, tag = 'scoped memory for tpu_custom_call.1']
    #allocation4 [shape = 's32[1]{0}', space=sflag, size = 0x4, scoped, tag = 'scoped memory for tpu_custom_call.1']
    #allocation5 [shape = 'u8[4096]{0}', space=vmem, size = 0x1000, scoped, tag = 'output window, operand 0, single buffered']
    %6 = vsyncpa [#allocation3], 0
    %7 = vsyncpa [#allocation4], 0
    // Predicated region
    $region2: #{tpu_custom_call.1} parent=1 // pred_check
      _
    $region3: #{tpu_custom_call.1} parent=1 // pred_check_branch
      %9 = sbr.rel (0) target = $region5
    $region4: #{tpu_custom_call.1} parent=1 // pred_region
      %11 = vsyncadd [#allocation3], 0
      %s13 = sshll.u32 %s0, 4
      %s14 = int_to_ptr.hbm [resolvable:$true] %s13
      %s15 = sshll.u32 [#allocation2], 4
      %s16 = int_to_ptr.vmem [resolvable:$true] %s15
      %18 = dma.hbm_to_vmem [thread:$0]  %s14, 128, %s16, [#allocation3]
    $region5: #{tpu_custom_call.1} parent=1 // pred_fallthru
      _
    // Predicated region
    $region6: #{tpu_custom_call.1} parent=1 // pred_check
      _
    $region7: #{tpu_custom_call.1} parent=1 // pred_check_branch
      %20 = sbr.rel (0) target = $region9
    $region8: #{tpu_custom_call.1} parent=1 // pred_region
      %22 = dma.done [#allocation3], 128
    $region9: #{tpu_custom_call.1} parent=1 // pred_fallthru
      _
    %v23 = vld [vmem:[#allocation2] sm:$0xff]
    %24 = vrot.lane.b32.xlu0 %v23, 1
    %v25 = vpop.permute.xlu0 %24
    %26 = vst [vmem:[#allocation5] sm:$0xff] %v25
    // Predicated region
    $region10: #{tpu_custom_call.1} parent=1 // pred_check
      _
    $region11: #{tpu_custom_call.1} parent=1 // pred_check_branch
      %28 = sbr.rel (0) target = $region13
    $region12: #{tpu_custom_call.1} parent=1 // pred_region
      %30 = vsyncadd [#allocation4], 0
      %s32 = sshll.u32 [#allocation5], 4
      %s33 = int_to_ptr.vmem [resolvable:$true] %s32
      %s34 = sshll.u32 %s1, 4
      %s35 = int_to_ptr.hbm [resolvable:$true] %s34
      %37 = dma.vmem_to_hbm [thread:$0]  %s33, 128, %s35, [#allocation4]
    $region13: #{tpu_custom_call.1} parent=1 // pred_fallthru
      _
    // Predicated region
    $region14: #{tpu_custom_call.1} parent=1 // pred_check
      _
    $region15: #{tpu_custom_call.1} parent=1 // pred_check_branch
      %39 = sbr.rel (0) target = $region17
    $region16: #{tpu_custom_call.1} parent=1 // pred_region
      %41 = dma.done [#allocation4], 128
    $region17: #{tpu_custom_call.1} parent=1 // pred_fallthru
      _
    %42 = vsyncpa [#allocation3], 1
    %43 = vsyncpa [#allocation4], 1

</llo_original>
